<compile_context>
chip_gen: v6e
topology: v6e:2x2x1
jax: 0.10.0
libtpu: 0.0.40
codegen_flags: <defaults>
</compile_context>

<pallas_src>
import jax
import jax.numpy as jnp
from jax.experimental import pallas as pl
from jax.experimental.pallas import tpu as pltpu


IN_DIM, H1, H2, OUT_DIM = 354, 128, 64, 1


def _mlp_kernel(x_ref, w1_ref, b1_ref, w2_ref, b2_ref, w3_ref, b3_ref, o_ref):
    # x tile: (TB, 354). Preferred contract: x is already bf16 in HBM (the
    # astype is then a no-op); f32 inputs are cast in-register. Both matmuls
    # take the native bf16 MXU path with f32 accumulation; bias adds / ReLUs
    # stay in f32 on the VPU.
    x = x_ref[...].astype(jnp.bfloat16)

    h1 = jnp.dot(x, w1_ref[...], preferred_element_type=jnp.float32)       # (TB, 128)
    h1 = jnp.maximum(h1 + b1_ref[...], 0.0)

    h2 = jnp.dot(h1.astype(jnp.bfloat16), w2_ref[...],
                 preferred_element_type=jnp.float32)                       # (TB, 64)
    h2 = jnp.maximum(h2 + b2_ref[...], 0.0)

    # Final (64 -> 1) layer: VPU multiply + lane reduce (skips an N=1 MXU
    # matmul that would use 1/128..1/256 of the MXU output width). b3 is a
    # scalar read from SMEM.
    out = jnp.sum(h2 * w3_ref[...], axis=-1, keepdims=True) + b3_ref[0, 0]  # (TB, 1)
    o_ref[...] = out.astype(o_ref.dtype)


def prepare_params(params):
    """One-time parameter prep (hoisted out of the per-call hot path).

    Takes PyTorch-style params (W: (out, in), b: (out,)) and returns
    kernel-ready tensors: transposed (in, out) bf16 matmul weights, f32 biases
    shaped for broadcasting, the final layer's weight row in f32 for the VPU
    reduction, and the scalar final bias as a (1,1) f32 array (lives in SMEM).
    """
    w1, b1, w2, b2, w3, b3 = params
    return (
        jnp.asarray(w1).T.astype(jnp.bfloat16),              # (354, 128)
        jnp.asarray(b1).reshape(1, H1).astype(jnp.float32),  # (1, 128)
        jnp.asarray(w2).T.astype(jnp.bfloat16),              # (128, 64)
        jnp.asarray(b2).reshape(1, H2).astype(jnp.float32),  # (1, 64)
        jnp.asarray(w3).reshape(1, H2).astype(jnp.float32),  # (1, 64) row for VPU
        jnp.asarray(b3).reshape(1, 1).astype(jnp.float32),   # (1, 1) scalar (SMEM)
    )


def prepare_input(x):
    """Stage x as bf16 once at the producer (halves the dominant HBM stream).

    Only worth doing if the producer can emit bf16 directly or the cast is
    fused upstream; the kernel also accepts f32 x unchanged.
    """
    return jnp.asarray(x).astype(jnp.bfloat16)


def _round_up(n, m):
    return (n + m - 1) // m * m


def _chip_config():
    """Pick (tb, vmem_limit, min grid steps) from the local TPU generation."""
    try:
        kind = jax.devices()[0].device_kind.lower()
    except Exception:  # pragma: no cover - defensive
        kind = ""
    if ("v5" in kind) or ("v6" in kind):
        # 128 MiB physical VMEM -> larger tile + higher scoped limit;
        # single TensorCore, so ~4 total grid steps suffice for pipelining.
        return dict(tb=4096, vmem_limit_bytes=64 << 20, min_steps=4)
    # v7x (64 MiB VMEM per TC, 2 TCs) and unknown chips: conservative tile,
    # default scoped VMEM, and enough steps to feed both TensorCores.
    return dict(tb=2048, vmem_limit_bytes=32 << 20, min_steps=8)


def _auto_tile(B, tb, min_steps):
    """Round tb to a multiple of 128, keep it <= padded B, and shrink it so the
    grid has at least `min_steps` steps when B permits (pipeline overlap and,
    on v7x, work for both TensorCores)."""
    tb = _round_up(max(128, tb), 128)
    tb = min(tb, _round_up(B, 128))
    cap = _round_up(pl.cdiv(B, min_steps), 128)
    return max(128, min(tb, cap))


def predict_reddit_post(x, prepared_params, *, tb=None):
    """Forward pass. x: (B, 354) bf16 (preferred) or f32 -> (B, 1) float32.

    prepared_params: output of prepare_params().
    tb: optional batch tile override; by default chosen per chip generation.
        Ragged batch tails are handled by Pallas edge-block masking (no
        wrapper padding pass over x).
    """
    w1t, b1r, w2t, b2r, w3r, b3s = prepared_params
    B = x.shape[0]

    cfg = _chip_config()
    tb = _auto_tile(B, cfg["tb"] if tb is None else tb, cfg["min_steps"])
    grid = (pl.cdiv(B, tb),)

    return pl.pallas_call(
        _mlp_kernel,
        out_shape=jax.ShapeDtypeStruct((B, OUT_DIM), jnp.float32),
        grid=grid,
        in_specs=[
            # x: batch-tiled, double-buffered / pipelined across the grid.
            pl.BlockSpec((tb, IN_DIM), lambda i: (i, 0)),
            # Weights & biases: constant block index -> resident in VMEM.
            pl.BlockSpec((IN_DIM, H1), lambda i: (0, 0)),
            pl.BlockSpec((1, H1), lambda i: (0, 0)),
            pl.BlockSpec((H1, H2), lambda i: (0, 0)),
            pl.BlockSpec((1, H2), lambda i: (0, 0)),
            pl.BlockSpec((1, H2), lambda i: (0, 0)),
            # Scalar final bias: SMEM (a (1,1) VMEM block would pad to a full
            # (8,128) tile plus a double-buffered DMA pair).
            pl.BlockSpec(memory_space=pltpu.MemorySpace.SMEM),
        ],
        out_specs=pl.BlockSpec((tb, OUT_DIM), lambda i: (i, 0)),
        compiler_params=pltpu.CompilerParams(
            dimension_semantics=("parallel",),   # megacore sharding on v7x
            vmem_limit_bytes=cfg["vmem_limit_bytes"],
        ),
    )(x, w1t, b1r, w2t, b2r, w3r, b3s)


def init_params(key):
    """Deterministic init mimicking nn.Linear's uniform(-1/sqrt(fan_in), ...)."""
    def linear_init(k, out_f, in_f):
        kw, kb = jax.random.split(k)
        bound = 1.0 / jnp.sqrt(in_f)
        w = jax.random.uniform(kw, (out_f, in_f), jnp.float32, -bound, bound)
        b = jax.random.uniform(kb, (out_f,), jnp.float32, -bound, bound)
        return w, b

    k1, k2, k3 = jax.random.split(key, 3)
    w1, b1 = linear_init(k1, H1, IN_DIM)
    w2, b2 = linear_init(k2, H2, H1)
    w3, b3 = linear_init(k3, OUT_DIM, H2)
    return (w1, b1, w2, b2, w3, b3)


def _reference(x_f32, raw_params):
    w1, b1, w2, b2, w3, b3 = raw_params
    h1 = jnp.maximum(x_f32 @ w1.T + b1, 0.0)
    h2 = jnp.maximum(h1 @ w2.T + b2, 0.0)
    return h2 @ w3.T + b3


if __name__ == "__main__":
    key = jax.random.PRNGKey(0)
    kp, kx = jax.random.split(key)

    raw_params = init_params(kp)
    params = prepare_params(raw_params)   # one-time prep (transpose + bf16 cast)

    # Small test batch; the auto-tiler picks tb=128 here, giving a 3-step grid
    # with a ragged last tile (300 % 128 != 0) handled by edge-block masking.
    B = 300
    x_f32 = jax.random.normal(kx, (B, IN_DIM), jnp.float32)

    # --- Preferred path: bf16 input staged once at the producer. -------------
    x_bf16 = prepare_input(x_f32)
    out_bf = jax.block_until_ready(predict_reddit_post(x_bf16, params))
    ref_bf = _reference(x_bf16.astype(jnp.float32), raw_params)
    assert out_bf.shape == (B, OUT_DIM)
    # bf16 matmul inputs with f32 accumulation -> small numeric delta vs f32 ref.
    assert jnp.allclose(out_bf, ref_bf, atol=3e-2, rtol=3e-2), float(
        jnp.max(jnp.abs(out_bf - ref_bf)))

    # --- Back-compat path: f32 input, cast to bf16 in-kernel. ----------------
    out_f32 = jax.block_until_ready(predict_reddit_post(x_f32, params, tb=128))
    ref_f32 = _reference(x_f32, raw_params)
    assert out_f32.shape == (B, OUT_DIM)
    assert jnp.allclose(out_f32, ref_f32, atol=3e-2, rtol=3e-2), float(
        jnp.max(jnp.abs(out_f32 - ref_f32)))

    print("KERNEL_OK")
</pallas_src>

<mosaic_0001>
module attributes {stable_mosaic.version = 11 : i64} {
  func.func @_mlp_kernel(%arg0: i32, %arg1: memref<128x354xbf16, #tpu.memory_space<vmem>>, %arg2: memref<354x128xbf16, #tpu.memory_space<vmem>>, %arg3: memref<1x128xf32, #tpu.memory_space<vmem>>, %arg4: memref<128x64xbf16, #tpu.memory_space<vmem>>, %arg5: memref<1x64xf32, #tpu.memory_space<vmem>>, %arg6: memref<1x64xf32, #tpu.memory_space<vmem>>, %arg7: memref<1x1xf32, #tpu.memory_space<smem>>, %arg8: memref<128x1xf32, #tpu.memory_space<vmem>>) attributes {dimension_semantics = [#tpu.dimension_semantics<parallel>], iteration_bounds = array<i64: 3>, scalar_prefetch = 0 : i64, scratch_operands = 0 : i64, tpu.core_type = #tpu.core_type<tc>, window_params = [{transform_indices = @transform_0, window_bounds = array<i64: 128, 354>}, {pipeline_mode = #tpu.pipeline_mode<synchronous>, transform_indices = @transform_1, window_bounds = array<i64: 354, 128>}, {pipeline_mode = #tpu.pipeline_mode<synchronous>, transform_indices = @transform_2, window_bounds = array<i64: 1, 128>}, {pipeline_mode = #tpu.pipeline_mode<synchronous>, transform_indices = @transform_3, window_bounds = array<i64: 128, 64>}, {pipeline_mode = #tpu.pipeline_mode<synchronous>, transform_indices = @transform_4, window_bounds = array<i64: 1, 64>}, {pipeline_mode = #tpu.pipeline_mode<synchronous>, transform_indices = @transform_5, window_bounds = array<i64: 1, 64>}, {transform_indices = @transform_6, window_bounds = array<i64: 1, 1>}, {transform_indices = @transform_7, window_bounds = array<i64: 128, 1>}]} {
    %c0 = arith.constant 0 : index
    %c0_0 = arith.constant 0 : index
    %0 = vector.load %arg1[%c0, %c0_0] : memref<128x354xbf16, #tpu.memory_space<vmem>>, vector<128x354xbf16>
    %c0_1 = arith.constant 0 : index
    %c0_2 = arith.constant 0 : index
    %1 = vector.load %arg2[%c0_1, %c0_2] : memref<354x128xbf16, #tpu.memory_space<vmem>>, vector<354x128xbf16>
    %cst = arith.constant dense<0.000000e+00> : vector<128x128xf32>
    %2 = tpu.matmul %0, %1, %cst {dimension_numbers = #tpu.dot_dimension_numbers<[1], [0], [0], [1], [0, 0, 1, 1], [], []>} : vector<128x354xbf16>, vector<354x128xbf16>, vector<128x128xf32> -> vector<128x128xf32>
    %c0_3 = arith.constant 0 : index
    %c0_4 = arith.constant 0 : index
    %3 = vector.load %arg3[%c0_3, %c0_4] : memref<1x128xf32, #tpu.memory_space<vmem>>, vector<1x128xf32>
    %4 = vector.broadcast %3 : vector<1x128xf32> to vector<128x128xf32>
    %5 = arith.addf %2, %4 : vector<128x128xf32>
    %cst_5 = arith.constant 0.000000e+00 : f32
    %6 = vector.broadcast %cst_5 : f32 to vector<128x128xf32>
    %7 = arith.maximumf %5, %6 : vector<128x128xf32>
    %8 = arith.truncf %7 : vector<128x128xf32> to vector<128x128xbf16>
    %c0_6 = arith.constant 0 : index
    %c0_7 = arith.constant 0 : index
    %9 = vector.load %arg4[%c0_6, %c0_7] : memref<128x64xbf16, #tpu.memory_space<vmem>>, vector<128x64xbf16>
    %cst_8 = arith.constant dense<0.000000e+00> : vector<128x64xf32>
    %10 = tpu.matmul %8, %9, %cst_8 {dimension_numbers = #tpu.dot_dimension_numbers<[1], [0], [0], [1], [0, 0, 1, 1], [], []>} : vector<128x128xbf16>, vector<128x64xbf16>, vector<128x64xf32> -> vector<128x64xf32>
    %c0_9 = arith.constant 0 : index
    %c0_10 = arith.constant 0 : index
    %11 = vector.load %arg5[%c0_9, %c0_10] : memref<1x64xf32, #tpu.memory_space<vmem>>, vector<1x64xf32>
    %12 = vector.broadcast %11 : vector<1x64xf32> to vector<128x64xf32>
    %13 = arith.addf %10, %12 : vector<128x64xf32>
    %cst_11 = arith.constant 0.000000e+00 : f32
    %14 = vector.broadcast %cst_11 : f32 to vector<128x64xf32>
    %15 = arith.maximumf %13, %14 : vector<128x64xf32>
    %c0_12 = arith.constant 0 : index
    %c0_13 = arith.constant 0 : index
    %16 = vector.load %arg6[%c0_12, %c0_13] : memref<1x64xf32, #tpu.memory_space<vmem>>, vector<1x64xf32>
    %17 = vector.broadcast %16 : vector<1x64xf32> to vector<128x64xf32>
    %18 = arith.mulf %15, %17 : vector<128x64xf32>
    %cst_14 = arith.constant dense<0.000000e+00> : vector<128xf32>
    %19 = vector.multi_reduction <add>, %18, %cst_14 [1] : vector<128x64xf32> to vector<128xf32>
    %20 = vector.shape_cast %19 : vector<128xf32> to vector<128x1xf32>
    %c0_15 = arith.constant 0 : index
    %c0_16 = arith.constant 0 : index
    %21 = memref.load %arg7[%c0_15, %c0_16] : memref<1x1xf32, #tpu.memory_space<smem>>
    %22 = vector.broadcast %21 : f32 to vector<128x1xf32>
    %23 = arith.addf %20, %22 : vector<128x1xf32>
    %c0_17 = arith.constant 0 : index
    %c0_18 = arith.constant 0 : index
    %24 = vector.load %arg8[%c0_17, %c0_18] : memref<128x1xf32, #tpu.memory_space<vmem>>, vector<128x1xf32>
    tpu.vector_store %arg8[%c0_17, %c0_18], %23 {strides = array<i32>} : memref<128x1xf32, #tpu.memory_space<vmem>>, vector<128x1xf32>,
    return
  }
  func.func @transform_0(%arg0: i32) -> (i32, i32) {
    %c0_i32 = arith.constant 0 : i32
    %c0_i32_0 = arith.constant 0 : i32
    return %arg0, %c0_i32 : i32, i32
  }
  func.func @transform_1(%arg0: i32) -> (i32, i32) {
    %c0_i32 = arith.constant 0 : i32
    %c0_i32_0 = arith.constant 0 : i32
    %c0_i32_1 = arith.constant 0 : i32
    return %c0_i32, %c0_i32_0 : i32, i32
  }
  func.func @transform_2(%arg0: i32) -> (i32, i32) {
    %c0_i32 = arith.constant 0 : i32
    %c0_i32_0 = arith.constant 0 : i32
    %c0_i32_1 = arith.constant 0 : i32
    return %c0_i32, %c0_i32_0 : i32, i32
  }
  func.func @transform_3(%arg0: i32) -> (i32, i32) {
    %c0_i32 = arith.constant 0 : i32
    %c0_i32_0 = arith.constant 0 : i32
    %c0_i32_1 = arith.constant 0 : i32
    return %c0_i32, %c0_i32_0 : i32, i32
  }
  func.func @transform_4(%arg0: i32) -> (i32, i32) {
    %c0_i32 = arith.constant 0 : i32
    %c0_i32_0 = arith.constant 0 : i32
    %c0_i32_1 = arith.constant 0 : i32
    return %c0_i32, %c0_i32_0 : i32, i32
  }
  func.func @transform_5(%arg0: i32) -> (i32, i32) {
    %c0_i32 = arith.constant 0 : i32
    %c0_i32_0 = arith.constant 0 : i32
    %c0_i32_1 = arith.constant 0 : i32
    return %c0_i32, %c0_i32_0 : i32, i32
  }
  func.func @transform_6(%arg0: i32) -> (i32, i32) {
    %c0_i32 = arith.constant 0 : i32
    %c0_i32_0 = arith.constant 0 : i32
    %c0_i32_1 = arith.constant 0 : i32
    return %c0_i32, %c0_i32_0 : i32, i32
  }
  func.func @transform_7(%arg0: i32) -> (i32, i32) {
    %c0_i32 = arith.constant 0 : i32
    %c0_i32_0 = arith.constant 0 : i32
    return %arg0, %c0_i32 : i32, i32
  }
}

</mosaic_0001>

<llo_original>
// kernel: tpu_custom_call.1
$region0: #{tpu_custom_call.1}
  #allocation0 [shape = 'u32[]', space=smem, size = 0x4, offset = 0x4, fixed_abs, tag = 'smem constant byte address 0x4 - core index']
  #allocation1 [shape = 'u32[144,128]{1,0:T(1,128)}', space=vmem, size = 0x12000, scoped, tag = 'internal scratch']
  #allocation2 [shape = 'f32[1,1]{1,0:T(1,128)S(6)}', space=smem, size = 0x200, scoped, tag = 'scoped memory for tpu_custom_call.1']
  %s0 = inlined_call_operand.hbm [shape: bf16[300,354], index: 0, kind: input, shape index: {}]
  %s1 = inlined_call_operand.hbm [shape: bf16[354,128], index: 1, kind: input, shape index: {}]
  %s2 = inlined_call_operand.vmem [shape: f32[1,128], index: 2, kind: input, shape index: {}]
  %s3 = inlined_call_operand.vmem [shape: bf16[128,64], index: 3, kind: input, shape index: {}]
  %s4 = inlined_call_operand.vmem [shape: f32[1,64], index: 4, kind: input, shape index: {}]
  %s5 = inlined_call_operand.vmem [shape: f32[1,64], index: 5, kind: input, shape index: {}]
  %s6 = inlined_call_operand.<no memory space> [shape: f32[1,1], index: 6, kind: input, shape index: {}]
  %s7 = inlined_call_operand.vmem [shape: f32[300,1], index: 7, kind: output, shape index: {}]
  %s8 = sld [smem:[#allocation0]]
  $region117: #{tpu_custom_call.1} parent=0
    _
  %s10 = ssub.s32 1, %s8
  %s11 = scalar_select 0, %s10, %s8
  %12 = sst [smem:[#allocation2]] %s6
  $region1: #{tpu_custom_call.1} parent=0
    #allocation3 [shape = 'u8[196608]{0}', space=vmem, size = 0x30000, scoped, tag = 'input window, operand 0']
    #allocation4 [shape = 's32[2]{0}', space=sflag, size = 0x8, scoped, tag = 'scoped memory for tpu_custom_call.1']
    #allocation5 [shape = 'u8[92160]{0}', space=vmem, size = 0x16800, scoped, tag = 'input window, operand 1, single buffered']
    #allocation6 [shape = 's32[1]{0}', space=sflag, size = 0x4, scoped, tag = 'scoped memory for tpu_custom_call.1']
    #allocation7 [shape = 'u8[131072]{0}', space=vmem, size = 0x20000, scoped, tag = 'output window, operand 0']
    %13 = vsyncpa [#allocation4], 0
    %s14 = scalar_lea.sflag [#allocation4], 1
    %15 = vsyncpa %s14, 0
    %16 = vsyncpa [#allocation6], 0
    loop: start=0, step=1, limit=5
    $region2: #{tpu_custom_call.1} parent=1 // loop_pre_header
      _
    $region3: #{tpu_custom_call.1} parent=1 // loop_header
      %s18 = sphi 0, %s22
      %p19 = scmp.ge.s32.totalorder %s18, 5
      %s28 = sphi 0, %s30
      %s31 = sphi 0, %s28
      %s32 = sphi 0, %s31
      %s48 = sphi 0, %s32
      %s52 = sphi 0, %s52
      %s54 = sphi 0, %s52
      %s55 = sphi 0, %s54
      %s69 = sphi 0, %s55
      %s73 = sphi 0, %s73
      %s75 = sphi 0, %s73
      %s76 = sphi 0, %s75
      %s90 = sphi 0, %s76
      %s94 = sphi 0, %s94
      %s96 = sphi 0, %s94
      %s97 = sphi 0, %s96
      %s111 = sphi 0, %s97
      %s115 = sphi 0, %s115
      %s117 = sphi 0, %s115
      %s118 = sphi 0, %s117
      %s132 = sphi 0, %s118
      %s136 = sphi 0, %s136
      %s138 = sphi 0, %s136
      %s139 = sphi 0, %s138
      %s153 = sphi 0, %s139
      %s157 = sphi 0, %s157
      %s159 = sphi 0, %s157
      %s160 = sphi 0, %s159
      %s174 = sphi 0, %s160
      %s180 = sphi 0, %s182
      %s183 = sphi 0, %s180
      %s184 = sphi 0, %s183
      %s200 = sphi 0, %s184
    $region4: #{tpu_custom_call.1} parent=1 // loop_header_branch
      %21 = sbr.rel (%p19) target = $region8
    $region5: #{tpu_custom_call.1} parent=1 // loop_body
      %s23 = ssub.s32 %s18, 1
      %s24 = ssub.s32 %s18, 2
      %s25 = sadd.s32 %s18, 1
      %s26 = ssub.s32 %s18, %s25
      %p27 = scmp.eq.s32.totalorder %s26, 0
      %s29 = sadd.s32 %s28, 1
      %s30 = scalar_select %p27, %s28, %s29
      %p33 = pneg %p27
      %p34 = scmp.eq.s32.totalorder %s18, 2
      %p35 = por %p33, %p34
      %p36 = scmp.ne.s32.totalorder %s28, %s31
      %p37 = scmp.eq.s32.totalorder %s18, 0
      %p38 = por %p36, %p37
      %p39 = scmp.ne.s32.totalorder %s28, %s31
      %p40 = scmp.eq.s32.totalorder %s23, 2
      %p41 = por %p39, %p40
      %p42 = scmp.ne.s32.totalorder %s31, %s32
      %p43 = scmp.eq.s32.totalorder %s23, 0
      %p44 = por %p42, %p43
      %p45 = scmp.ne.s32.totalorder %s31, %s32
      %p46 = scmp.eq.s32.totalorder %s24, 2
      %p47 = por %p45, %p46
      %p49 = scmp.ne.s32.totalorder %s32, %s48
      %p50 = scmp.eq.s32.totalorder %s24, 0
      %p51 = por %p49, %p50
      %s53 = sadd.s32 %s52, 1
      %p56 = scmp.eq.s32.totalorder %s18, 2
      %p57 = scmp.ne.s32.totalorder %s52, %s54
      %p58 = scmp.eq.s32.totalorder %s18, 0
      %p59 = por %p57, %p58
      %p60 = scmp.ne.s32.totalorder %s52, %s54
      %p61 = scmp.eq.s32.totalorder %s23, 2
      %p62 = por %p60, %p61
      %p63 = scmp.ne.s32.totalorder %s54, %s55
      %p64 = scmp.eq.s32.totalorder %s23, 0
      %p65 = por %p63, %p64
      %p66 = scmp.ne.s32.totalorder %s54, %s55
      %p67 = scmp.eq.s32.totalorder %s24, 2
      %p68 = por %p66, %p67
      %p70 = scmp.ne.s32.totalorder %s55, %s69
      %p71 = scmp.eq.s32.totalorder %s24, 0
      %p72 = por %p70, %p71
      %s74 = sadd.s32 %s73, 1
      %p77 = scmp.eq.s32.totalorder %s18, 2
      %p78 = scmp.ne.s32.totalorder %s73, %s75
      %p79 = scmp.eq.s32.totalorder %s18, 0
      %p80 = por %p78, %p79
      %p81 = scmp.ne.s32.totalorder %s73, %s75
      %p82 = scmp.eq.s32.totalorder %s23, 2
      %p83 = por %p81, %p82
      %p84 = scmp.ne.s32.totalorder %s75, %s76
      %p85 = scmp.eq.s32.totalorder %s23, 0
      %p86 = por %p84, %p85
      %p87 = scmp.ne.s32.totalorder %s75, %s76
      %p88 = scmp.eq.s32.totalorder %s24, 2
      %p89 = por %p87, %p88
      %p91 = scmp.ne.s32.totalorder %s76, %s90
      %p92 = scmp.eq.s32.totalorder %s24, 0
      %p93 = por %p91, %p92
      %s95 = sadd.s32 %s94, 1
      %p98 = scmp.eq.s32.totalorder %s18, 2
      %p99 = scmp.ne.s32.totalorder %s94, %s96
      %p100 = scmp.eq.s32.totalorder %s18, 0
      %p101 = por %p99, %p100
      %p102 = scmp.ne.s32.totalorder %s94, %s96
      %p103 = scmp.eq.s32.totalorder %s23, 2
      %p104 = por %p102, %p103
      %p105 = scmp.ne.s32.totalorder %s96, %s97
      %p106 = scmp.eq.s32.totalorder %s23, 0
      %p107 = por %p105, %p106
      %p108 = scmp.ne.s32.totalorder %s96, %s97
      %p109 = scmp.eq.s32.totalorder %s24, 2
      %p110 = por %p108, %p109
      %p112 = scmp.ne.s32.totalorder %s97, %s111
      %p113 = scmp.eq.s32.totalorder %s24, 0
      %p114 = por %p112, %p113
      %s116 = sadd.s32 %s115, 1
      %p119 = scmp.eq.s32.totalorder %s18, 2
      %p120 = scmp.ne.s32.totalorder %s115, %s117
      %p121 = scmp.eq.s32.totalorder %s18, 0
      %p122 = por %p120, %p121
      %p123 = scmp.ne.s32.totalorder %s115, %s117
      %p124 = scmp.eq.s32.totalorder %s23, 2
      %p125 = por %p123, %p124
      %p126 = scmp.ne.s32.totalorder %s117, %s118
      %p127 = scmp.eq.s32.totalorder %s23, 0
      %p128 = por %p126, %p127
      %p129 = scmp.ne.s32.totalorder %s117, %s118
      %p130 = scmp.eq.s32.totalorder %s24, 2
      %p131 = por %p129, %p130
      %p133 = scmp.ne.s32.totalorder %s118, %s132
      %p134 = scmp.eq.s32.totalorder %s24, 0
      %p135 = por %p133, %p134
      %s137 = sadd.s32 %s136, 1
      %p140 = scmp.eq.s32.totalorder %s18, 2
      %p141 = scmp.ne.s32.totalorder %s136, %s138
      %p142 = scmp.eq.s32.totalorder %s18, 0
      %p143 = por %p141, %p142
      %p144 = scmp.ne.s32.totalorder %s136, %s138
      %p145 = scmp.eq.s32.totalorder %s23, 2
      %p146 = por %p144, %p145
      %p147 = scmp.ne.s32.totalorder %s138, %s139
      %p148 = scmp.eq.s32.totalorder %s23, 0
      %p149 = por %p147, %p148
      %p150 = scmp.ne.s32.totalorder %s138, %s139
      %p151 = scmp.eq.s32.totalorder %s24, 2
      %p152 = por %p150, %p151
      %p154 = scmp.ne.s32.totalorder %s139, %s153
      %p155 = scmp.eq.s32.totalorder %s24, 0
      %p156 = por %p154, %p155
      %s158 = sadd.s32 %s157, 1
      %p161 = scmp.eq.s32.totalorder %s18, 2
      %p162 = scmp.ne.s32.totalorder %s157, %s159
      %p163 = scmp.eq.s32.totalorder %s18, 0
      %p164 = por %p162, %p163
      %p165 = scmp.ne.s32.totalorder %s157, %s159
      %p166 = scmp.eq.s32.totalorder %s23, 2
      %p167 = por %p165, %p166
      %p168 = scmp.ne.s32.totalorder %s159, %s160
      %p169 = scmp.eq.s32.totalorder %s23, 0
      %p170 = por %p168, %p169
      %p171 = scmp.ne.s32.totalorder %s159, %s160
      %p172 = scmp.eq.s32.totalorder %s24, 2
      %p173 = por %p171, %p172
      %p175 = scmp.ne.s32.totalorder %s160, %s174
      %p176 = scmp.eq.s32.totalorder %s24, 0
      %p177 = por %p175, %p176
      %s178 = ssub.s32 %s18, %s25
      %p179 = scmp.eq.s32.totalorder %s178, 0
      %s181 = sadd.s32 %s180, 1
      %s182 = scalar_select %p179, %s180, %s181
      %p185 = pneg %p179
      %p186 = scmp.eq.s32.totalorder %s18, 2
      %p187 = por %p185, %p186
      %p188 = scmp.ne.s32.totalorder %s180, %s183
      %p189 = scmp.eq.s32.totalorder %s18, 0
      %p190 = por %p188, %p189
      %p191 = scmp.ne.s32.totalorder %s180, %s183
      %p192 = scmp.eq.s32.totalorder %s23, 2
      %p193 = por %p191, %p192
      %p194 = scmp.ne.s32.totalorder %s183, %s184
      %p195 = scmp.eq.s32.totalorder %s23, 0
      %p196 = por %p194, %p195
      %p197 = scmp.ne.s32.totalorder %s183, %s184
      %p198 = scmp.eq.s32.totalorder %s24, 2
      %p199 = por %p197, %p198
      %p201 = scmp.ne.s32.totalorder %s184, %s200
      %p202 = scmp.eq.s32.totalorder %s24, 0
      %p203 = por %p201, %p202
      %p204 = scmp.le.s32.totalorder 1, %s18
      %p205 = scmp.lt.s32.totalorder %s18, 4
      %p206 = pnand %p204, %p205
      %p207 = pneg %p206
      // Predicated region
      $region9: #{tpu_custom_call.1} parent=5 // pred_check
        _
      $region10: #{tpu_custom_call.1} parent=5 // pred_check_branch
        %209 = sbr.rel (%p206) target = $region12
      $region11: #{tpu_custom_call.1} parent=5 // pred_region
        %s210 = ssub.s32 %s18, 1
        // Predicated region
        $region13: #{tpu_custom_call.1} parent=11 // pred_check
          %p211 = pneg %p65
        $region14: #{tpu_custom_call.1} parent=11 // pred_check_branch
          %213 = sbr.rel (%p211) target = $region16
        $region15: #{tpu_custom_call.1} parent=11 // pred_region
          %s215 = ssub.s32 2880, 2880
          %216 = vsyncadd [#allocation6], %s215
          %s217 = sshll.u32 [#allocation5], 4
          %s218 = int_to_ptr.vmem [resolvable:$true] %s217
          %223 = dma.hbm_to_vmem [thread:$0]  %s1, 2880, %s218, [#allocation6], 64, 64, 4
        $region16: #{tpu_custom_call.1} parent=11 // pred_fallthru
          _
        // Predicated region
        $region17: #{tpu_custom_call.1} parent=11 // pred_check
          %p224 = pneg %p86
        $region18: #{tpu_custom_call.1} parent=11 // pred_check_branch
          %226 = sbr.rel (%p224) target = $region20
        $region19: #{tpu_custom_call.1} parent=11 // pred_region
          _
        $region20: #{tpu_custom_call.1} parent=11 // pred_fallthru
          _
        // Predicated region
        $region21: #{tpu_custom_call.1} parent=11 // pred_check
          %p227 = pneg %p107
        $region22: #{tpu_custom_call.1} parent=11 // pred_check_branch
          %229 = sbr.rel (%p227) target = $region24
        $region23: #{tpu_custom_call.1} parent=11 // pred_region
          _
        $region24: #{tpu_custom_call.1} parent=11 // pred_fallthru
          _
        // Predicated region
        $region25: #{tpu_custom_call.1} parent=11 // pred_check
          %p230 = pneg %p128
        $region26: #{tpu_custom_call.1} parent=11 // pred_check_branch
          %232 = sbr.rel (%p230) target = $region28
        $region27: #{tpu_custom_call.1} parent=11 // pred_region
          _
        $region28: #{tpu_custom_call.1} parent=11 // pred_fallthru
          _
        // Predicated region
        $region29: #{tpu_custom_call.1} parent=11 // pred_check
          %p233 = pneg %p149
        $region30: #{tpu_custom_call.1} parent=11 // pred_check_branch
          %235 = sbr.rel (%p233) target = $region32
        $region31: #{tpu_custom_call.1} parent=11 // pred_region
          _
        $region32: #{tpu_custom_call.1} parent=11 // pred_fallthru
          _
        // Predicated region
        $region33: #{tpu_custom_call.1} parent=11 // pred_check
          %p236 = pneg %p170
        $region34: #{tpu_custom_call.1} parent=11 // pred_check_branch
          %238 = sbr.rel (%p236) target = $region36
        $region35: #{tpu_custom_call.1} parent=11 // pred_region
          _
        $region36: #{tpu_custom_call.1} parent=11 // pred_fallthru
          _
      $region12: #{tpu_custom_call.1} parent=5 // pred_fallthru
        _
      %p239 = scmp.lt.s32.totalorder %s18, 3
      // Predicated region
      $region37: #{tpu_custom_call.1} parent=5 // pred_check
        %p240 = pneg %p239
      $region38: #{tpu_custom_call.1} parent=5 // pred_check_branch
        %242 = sbr.rel (%p240) target = $region40
      $region39: #{tpu_custom_call.1} parent=5 // pred_region
        // Predicated region
        $region41: #{tpu_custom_call.1} parent=39 // pred_check
          %p243 = pneg %p38
        $region42: #{tpu_custom_call.1} parent=39 // pred_check_branch
          %245 = sbr.rel (%p243) target = $region44
        $region43: #{tpu_custom_call.1} parent=39 // pred_region
          %s246 = sand.u32 %s28, 1
          %s247 = scalar_lea.sflag [#allocation4], %s246
          %s248 = sand.u32 %s28, 1
          %s249 = smul.addr %s248, 192
          %s250 = scalar_lea.vmem [#allocation3], %s249
          %s251 = smul.u32 16, %s18
          %s252 = ssub.s32 38, %s251
          %p253 = scmp.lt.s32.totalorder %s252, 16
          %s254 = scalar_select %p253, %s252, 16
          %s255 = smul.u32 64, %s254
          %s256 = smul.u32 %s255, 3
          %s258 = ssub.s32 3072, %s256
          %259 = vsyncadd %s247, %s258
          %p260 = scmp.ne.s32.totalorder 0, %s256
          %s261 = smul.addr %s251, 3
          %s262 = smul.addr %s261, 64
          %s263 = scalar_lea.hbm %s0, %s262
          %s264 = smul.u32 12, %s254
          %s265 = sshll.u32 %s250, 4
          %s266 = int_to_ptr.vmem [resolvable:$true] %s265
          %s267 = sshll.u32 %s264, 4
          %271 = dma.hbm_to_vmem [thread:$0]  (%p260), %s263, %s267, %s266, %s247, 192, 192, 12
        $region44: #{tpu_custom_call.1} parent=39 // pred_fallthru
          _
      $region40: #{tpu_custom_call.1} parent=5 // pred_fallthru
        _
      %p272 = scmp.le.s32.totalorder 1, %s18
      %p273 = scmp.lt.s32.totalorder %s18, 4
      %p274 = pnand %p272, %p273
      %p275 = pneg %p274
      // Predicated region
      $region45: #{tpu_custom_call.1} parent=5 // pred_check
        _
      $region46: #{tpu_custom_call.1} parent=5 // pred_check_branch
        %277 = sbr.rel (%p274) target = $region48
      $region47: #{tpu_custom_call.1} parent=5 // pred_region
        %s278 = ssub.s32 %s18, 1
        %s279 = sand.u32 %s31, 1
        %s280 = scalar_lea.sflag [#allocation4], %s279
        %s281 = sand.u32 %s31, 1
        %s282 = smul.addr %s281, 192
        %s283 = scalar_lea.vmem [#allocation3], %s282
        // Predicated region
        $region49: #{tpu_custom_call.1} parent=47 // pred_check
          %p284 = pneg %p44
        $region50: #{tpu_custom_call.1} parent=47 // pred_check_branch
          %286 = sbr.rel (%p284) target = $region52
        $region51: #{tpu_custom_call.1} parent=47 // pred_region
          %287 = dma.done %s280, 3072
        $region52: #{tpu_custom_call.1} parent=47 // pred_fallthru
          _
        // Predicated region
        $region53: #{tpu_custom_call.1} parent=47 // pred_check
          %p288 = pneg %p65
        $region54: #{tpu_custom_call.1} parent=47 // pred_check_branch
          %290 = sbr.rel (%p288) target = $region56
        $region55: #{tpu_custom_call.1} parent=47 // pred_region
          %291 = dma.done [#allocation6], 2880
        $region56: #{tpu_custom_call.1} parent=47 // pred_fallthru
          _
        %s292 = sand.u32 %s31, 1
        %s293 = scalar_lea.sflag [#allocation4], %s292
        %s294 = sand.u32 %s31, 1
        %s295 = smul.addr %s294, 192
        %s296 = scalar_lea.vmem [#allocation3], %s295
        %p297 = pneg %p44
        %p298 = pneg %p41
        %p299 = pneg %p65
        %p300 = pneg %p62
        %p301 = pneg %p86
        %p302 = pneg %p83
        %p303 = pneg %p107
        %p304 = pneg %p104
        %p305 = pneg %p128
        %p306 = pneg %p125
        %p307 = pneg %p149
        %p308 = pneg %p146
        %p309 = pneg %p170
        %p310 = pneg %p167
        %p311 = pneg %p196
        %p312 = pneg %p193
        %s313 = sand.u32 %s183, 1
        %s314 = sand.u32 %s183, 1
        %s315 = smul.addr %s314, 128
        %s316 = scalar_lea.vmem [#allocation7], %s315
        %s317 = smul.u32 16, %s23
        %s318 = ssub.s32 38, %s317
        %p319 = scmp.lt.s32.totalorder %s318, 16
        %s320 = scalar_select %p319, %s318, 16
        %s321 = smul.u32 64, %s320
        %s322 = smul.u32 %s321, 3
        %s323 = smul.u32 16, %s23
        %s324 = ssub.s32 38, %s323
        %p325 = scmp.lt.s32.totalorder %s324, 16
        %s326 = scalar_select %p325, %s324, 16
        %s327 = smul.u32 128, %s326
        %v329 = vld [vmem:[%s283] sm:$0xff]
        %v330 = vld [vmem:[%s283 + $0x8] sm:$0xf]
        %v331 = vld [vmem:[%s283 + $0xc] sm:$0xff]
        %v332 = vld [vmem:[%s283 + $0x14] sm:$0xf]
        %v333 = vld [vmem:[%s283 + $0x18] sm:$0xff]
        %v334 = vld [vmem:[%s283 + $0x20] sm:$0xf]
        %v335 = vld [vmem:[%s283 + $0x24] sm:$0xff]
        %v336 = vld [vmem:[%s283 + $0x2c] sm:$0xf]
        %v337 = vld [vmem:[%s283 + $0x30] sm:$0xff]
        %v338 = vld [vmem:[%s283 + $0x38] sm:$0xf]
        %v339 = vld [vmem:[%s283 + $0x3c] sm:$0xff]
        %v340 = vld [vmem:[%s283 + $0x44] sm:$0xf]
        %v341 = vld [vmem:[%s283 + $0x48] sm:$0xff]
        %v342 = vld [vmem:[%s283 + $0x50] sm:$0xf]
        %v343 = vld [vmem:[%s283 + $0x54] sm:$0xff]
        %v344 = vld [vmem:[%s283 + $0x5c] sm:$0xf]
        %v345 = vld [vmem:[%s283 + $0x60] sm:$0xff]
        %v346 = vld [vmem:[%s283 + $0x68] sm:$0xf]
        %v347 = vld [vmem:[%s283 + $0x6c] sm:$0xff]
        %v348 = vld [vmem:[%s283 + $0x74] sm:$0xf]
        %v349 = vld [vmem:[%s283 + $0x78] sm:$0xff]
        %v350 = vld [vmem:[%s283 + $0x80] sm:$0xf]
        %v351 = vld [vmem:[%s283 + $0x84] sm:$0xff]
        %v352 = vld [vmem:[%s283 + $0x8c] sm:$0xf]
        %v353 = vld [vmem:[%s283 + $0x90] sm:$0xff]
        %v354 = vld [vmem:[%s283 + $0x98] sm:$0xf]
        %v355 = vld [vmem:[%s283 + $0x9c] sm:$0xff]
        %v356 = vld [vmem:[%s283 + $0xa4] sm:$0xf]
        %v357 = vld [vmem:[%s283 + $0xa8] sm:$0xff]
        %v358 = vld [vmem:[%s283 + $0xb0] sm:$0xf]
        %v359 = vld [vmem:[%s283 + $0xb4] sm:$0xff]
        %v360 = vld [vmem:[%s283 + $0xbc] sm:$0xf]
        %v361 = vld [vmem:[#allocation5] sm:$0xf]
        %v362 = vld [vmem:[#allocation5 + $0x4] sm:$0xf]
        %v363 = vld [vmem:[#allocation5 + $0x8] sm:$0xf]
        %v364 = vld [vmem:[#allocation5 + $0xc] sm:$0xf]
        %v365 = vld [vmem:[#allocation5 + $0x10] sm:$0xf]
        %v366 = vld [vmem:[#allocation5 + $0x14] sm:$0xf]
        %v367 = vld [vmem:[#allocation5 + $0x18] sm:$0xf]
        %v368 = vld [vmem:[#allocation5 + $0x1c] sm:$0xf]
        %v369 = vld [vmem:[#allocation5 + $0x20] sm:$0xf]
        %v370 = vld [vmem:[#allocation5 + $0x24] sm:$0xf]
        %v371 = vld [vmem:[#allocation5 + $0x28] sm:$0xf]
        %v372 = vld [vmem:[#allocation5 + $0x2c] sm:$0xf]
        %v373 = vld [vmem:[#allocation5 + $0x30] sm:$0xf]
        %v374 = vld [vmem:[#allocation5 + $0x34] sm:$0xf]
        %v375 = vld [vmem:[#allocation5 + $0x38] sm:$0xf]
        %v376 = vld [vmem:[#allocation5 + $0x3c] sm:$0xf]
        %v377 = vld [vmem:[#allocation5 + $0x40] sm:$0xf]
        %v378 = vld [vmem:[#allocation5 + $0x44] sm:$0xf]
        %v379 = vld [vmem:[#allocation5 + $0x48] sm:$0xf]
        %v380 = vld [vmem:[#allocation5 + $0x4c] sm:$0xf]
        %v381 = vld [vmem:[#allocation5 + $0x50] sm:$0xf]
        %v382 = vld [vmem:[#allocation5 + $0x54] sm:$0xf]
        %v383 = vld [vmem:[#allocation5 + $0x58] sm:$0xf]
        %v384 = vld [vmem:[#allocation5 + $0x5c] sm:$0xf]
        %v385 = vld [vmem:[#allocation5 + $0x60] sm:$0xf]
        %v386 = vld [vmem:[#allocation5 + $0x64] sm:$0xf]
        %v387 = vld [vmem:[#allocation5 + $0x68] sm:$0xf]
        %v388 = vld [vmem:[#allocation5 + $0x6c] sm:$0xf]
        %v389 = vld [vmem:[#allocation5 + $0x70] sm:$0xf]
        %v390 = vld [vmem:[#allocation5 + $0x74] sm:$0xf]
        %v391 = vld [vmem:[#allocation5 + $0x78] sm:$0xf]
        %v392 = vld [vmem:[#allocation5 + $0x7c] sm:$0xf]
        %v393 = vld [vmem:[#allocation5 + $0x80] sm:$0xf]
        %v394 = vld [vmem:[#allocation5 + $0x84] sm:$0xf]
        %v395 = vld [vmem:[#allocation5 + $0x88] sm:$0xf]
        %v396 = vld [vmem:[#allocation5 + $0x8c] sm:$0xf]
        %v397 = vld [vmem:[#allocation5 + $0x90] sm:$0xf]
        %v398 = vld [vmem:[#allocation5 + $0x94] sm:$0xf]
        %v399 = vld [vmem:[#allocation5 + $0x98] sm:$0xf]
        %v400 = vld [vmem:[#allocation5 + $0x9c] sm:$0xf]
        %v401 = vld [vmem:[#allocation5 + $0xa0] sm:$0xf]
        %v402 = vld [vmem:[#allocation5 + $0xa4] sm:$0xf]
        %v403 = vld [vmem:[#allocation5 + $0xa8] sm:$0xf]
        %v404 = vld [vmem:[#allocation5 + $0xac] sm:$0xf]
        %v405 = vld [vmem:[#allocation5 + $0xb0] sm:$0x1]
        %v406 = vld [vmem:[%s2] sm:$0x1]
        %v408 = vlaneseq
        %v409 = vshrl.u32 %v408, 7
        %v410 = vsub.s32 0, %v409
        %v411 = vrot.slane %v406, %v410
        %v445 = vunpack.c.l.b16 %v329
        %v446 = vunpack.c.h.b16 %v329
        %v447 = vunpack.c.l.b16 %v330
        %v448 = vunpack.c.l.b16 %v331
        %v449 = vunpack.c.h.b16 %v331
        %v450 = vunpack.c.l.b16 %v332
        %v451 = vunpack.c.l.b16 %v333
        %v452 = vunpack.c.h.b16 %v333
        %v453 = vunpack.c.l.b16 %v334
        %v454 = vunpack.c.l.b16 %v335
        %v455 = vunpack.c.h.b16 %v335
        %v456 = vunpack.c.l.b16 %v336
        %v457 = vunpack.c.l.b16 %v337
        %v458 = vunpack.c.h.b16 %v337
        %v459 = vunpack.c.l.b16 %v338
        %v460 = vunpack.c.l.b16 %v339
        %v461 = vunpack.c.h.b16 %v339
        %v462 = vunpack.c.l.b16 %v340
        %v463 = vunpack.c.l.b16 %v341
        %v464 = vunpack.c.h.b16 %v341
        %v465 = vunpack.c.l.b16 %v342
        %v466 = vunpack.c.l.b16 %v343
        %v467 = vunpack.c.h.b16 %v343
        %v468 = vunpack.c.l.b16 %v344
        %v469 = vunpack.c.l.b16 %v345
        %v470 = vunpack.c.h.b16 %v345
        %v471 = vunpack.c.l.b16 %v346
        %v472 = vunpack.c.l.b16 %v347
        %v473 = vunpack.c.h.b16 %v347
        %v474 = vunpack.c.l.b16 %v348
        %v475 = vunpack.c.l.b16 %v349
        %v476 = vunpack.c.h.b16 %v349
        %v477 = vunpack.c.l.b16 %v350
        %v478 = vunpack.c.l.b16 %v351
        %v479 = vunpack.c.h.b16 %v351
        %v480 = vunpack.c.l.b16 %v352
        %v481 = vunpack.c.l.b16 %v353
        %v482 = vunpack.c.h.b16 %v353
        %v483 = vunpack.c.l.b16 %v354
        %v484 = vunpack.c.l.b16 %v355
        %v485 = vunpack.c.h.b16 %v355
        %v486 = vunpack.c.l.b16 %v356
        %v487 = vunpack.c.l.b16 %v357
        %v488 = vunpack.c.h.b16 %v357
        %v489 = vunpack.c.l.b16 %v358
        %v490 = vunpack.c.l.b16 %v359
        %v491 = vunpack.c.h.b16 %v359
        %v492 = vunpack.c.l.b16 %v360
        %v493 = vpack.c.b16 %v448, %v445
        %v494 = vpack.c.b16 %v449, %v446
        %v495 = vpack.c.b16 %v450, %v447
        %v496 = vpack.c.b16 %v454, %v451
        %v497 = vpack.c.b16 %v455, %v452
        %v498 = vpack.c.b16 %v456, %v453
        %v499 = vpack.c.b16 %v460, %v457
        %v500 = vpack.c.b16 %v461, %v458
        %v501 = vpack.c.b16 %v462, %v459
        %v502 = vpack.c.b16 %v466, %v463
        %v503 = vpack.c.b16 %v467, %v464
        %v504 = vpack.c.b16 %v468, %v465
        %v505 = vpack.c.b16 %v472, %v469
        %v506 = vpack.c.b16 %v473, %v470
        %v507 = vpack.c.b16 %v474, %v471
        %v508 = vpack.c.b16 %v478, %v475
        %v509 = vpack.c.b16 %v479, %v476
        %v510 = vpack.c.b16 %v480, %v477
        %v511 = vpack.c.b16 %v484, %v481
        %v512 = vpack.c.b16 %v485, %v482
        %v513 = vpack.c.b16 %v486, %v483
        %v514 = vpack.c.b16 %v490, %v487
        %v515 = vpack.c.b16 %v491, %v488
        %v516 = vpack.c.b16 %v492, %v489
        %v578 = vunpack.c.l.b16 %v361
        %v579 = vunpack.c.l.b16 %v362
        %v580 = vunpack.c.l.b16 %v363
        %v581 = vunpack.c.l.b16 %v364
        %v582 = vunpack.c.l.b16 %v365
        %v583 = vunpack.c.l.b16 %v366
        %v584 = vunpack.c.l.b16 %v367
        %v585 = vunpack.c.l.b16 %v368
        %v586 = vunpack.c.l.b16 %v369
        %v587 = vunpack.c.l.b16 %v370
        %v588 = vunpack.c.l.b16 %v371
        %v589 = vunpack.c.l.b16 %v372
        %v590 = vunpack.c.l.b16 %v373
        %v591 = vunpack.c.l.b16 %v374
        %v592 = vunpack.c.l.b16 %v375
        %v593 = vunpack.c.l.b16 %v376
        %v594 = vunpack.c.l.b16 %v377
        %v595 = vunpack.c.l.b16 %v378
        %v596 = vunpack.c.l.b16 %v379
        %v597 = vunpack.c.l.b16 %v380
        %v598 = vunpack.c.l.b16 %v381
        %v599 = vunpack.c.l.b16 %v382
        %v600 = vunpack.c.l.b16 %v383
        %v601 = vunpack.c.l.b16 %v384
        %v602 = vunpack.c.l.b16 %v385
        %v603 = vunpack.c.l.b16 %v386
        %v604 = vunpack.c.l.b16 %v387
        %v605 = vunpack.c.l.b16 %v388
        %v606 = vunpack.c.l.b16 %v389
        %v607 = vunpack.c.l.b16 %v390
        %v608 = vunpack.c.l.b16 %v391
        %v609 = vunpack.c.l.b16 %v392
        %v610 = vunpack.c.l.b16 %v393
        %v611 = vunpack.c.l.b16 %v394
        %v612 = vunpack.c.l.b16 %v395
        %v613 = vunpack.c.l.b16 %v396
        %v614 = vunpack.c.l.b16 %v397
        %v615 = vunpack.c.l.b16 %v398
        %v616 = vunpack.c.l.b16 %v399
        %v617 = vunpack.c.l.b16 %v400
        %v618 = vunpack.c.l.b16 %v401
        %v619 = vunpack.c.l.b16 %v402
        %v620 = vunpack.c.l.b16 %v403
        %v621 = vunpack.c.l.b16 %v404
        %v622 = vunpack.c.l.b16 %v405
        %v623 = vpack.c.b16 %v579, %v578
        %v624 = vpack.c.b16 %v581, %v580
        %v625 = vpack.c.b16 %v583, %v582
        %v626 = vpack.c.b16 %v585, %v584
        %v627 = vpack.c.b16 %v587, %v586
        %v628 = vpack.c.b16 %v589, %v588
        %v629 = vpack.c.b16 %v591, %v590
        %v630 = vpack.c.b16 %v593, %v592
        %v631 = vpack.c.b16 %v595, %v594
        %v632 = vpack.c.b16 %v597, %v596
        %v633 = vpack.c.b16 %v599, %v598
        %v634 = vpack.c.b16 %v601, %v600
        %v635 = vpack.c.b16 %v603, %v602
        %v636 = vpack.c.b16 %v605, %v604
        %v637 = vpack.c.b16 %v607, %v606
        %v638 = vpack.c.b16 %v609, %v608
        %v639 = vpack.c.b16 %v611, %v610
        %v640 = vpack.c.b16 %v613, %v612
        %v641 = vpack.c.b16 %v615, %v614
        %v642 = vpack.c.b16 %v617, %v616
        %v643 = vpack.c.b16 %v619, %v618
        %v644 = vpack.c.b16 %v621, %v620
        %v645 = vpack.c.b16 %v622, %v622
        %vm668 = vcmask 801792
        %v670 = vsel %vm668, %v495, 0
        %v673 = vsel %vm668, %v498, 0
        %v676 = vsel %vm668, %v501, 0
        %v679 = vsel %vm668, %v504, 0
        %v682 = vsel %vm668, %v507, 0
        %v685 = vsel %vm668, %v510, 0
        %v688 = vsel %vm668, %v513, 0
        %v691 = vsel %vm668, %v516, 0
        %vm693 = vcmask 1040384
        %v695 = vsel %vm693, %v645, 0
        %697 = vmatprep.subr.bf16.mxu0 0
        %698 = vmatpush1.bf16.msra.mxu0 %v630
        %699 = vmatprep.subr.bf16.mxu0 0
        %700 = vmatpush1.bf16.msra.mxu0 %v629
        %701 = vmatprep.subr.bf16.mxu0 0
        %702 = vmatpush1.bf16.msra.mxu0 %v628
        %703 = vmatprep.subr.bf16.mxu0 0
        %704 = vmatpush1.bf16.msra.mxu0 %v627
        %705 = vmatprep.subr.bf16.mxu0 0
        %706 = vmatpush1.bf16.msra.mxu0 %v626
        %707 = vmatprep.subr.bf16.mxu0 0
        %708 = vmatpush1.bf16.msra.mxu0 %v625
        %709 = vmatprep.subr.bf16.mxu0 0
        %710 = vmatpush1.bf16.msra.mxu0 %v624
        %711 = vmatprep.subr.bf16.mxu0 0
        %712 = vmatpush1.bf16.msra.mxu0 %v623
        %713 = vmatprep.subr.bf16.mxu0 0
        %714 = vmatpush2.bf16.msra.mxu0 %v638
        %715 = vmatprep.subr.bf16.mxu0 0
        %716 = vmatpush2.bf16.msra.mxu0 %v637
        %717 = vmatprep.subr.bf16.mxu0 0
        %718 = vmatpush2.bf16.msra.mxu0 %v636
        %719 = vmatprep.subr.bf16.mxu0 0
        %720 = vmatpush2.bf16.msra.mxu0 %v635
        %721 = vmatprep.subr.bf16.mxu0 0
        %722 = vmatpush2.bf16.msra.mxu0 %v634
        %723 = vmatprep.subr.bf16.mxu0 0
        %724 = vmatpush2.bf16.msra.mxu0 %v633
        %725 = vmatprep.subr.bf16.mxu0 0
        %726 = vmatpush2.bf16.msra.mxu0 %v632
        %727 = vmatprep.subr.bf16.mxu0 0
        %728 = vmatpush2.bf16.msra.mxu0 %v631
        %729 = vmatprep.mubr.bf16.mxu0 %v494
        %730 = vmatmul.mubr.bf16.gmra.mxu0 %v493
        %v731 = vpop.f32.mrf.mxu0
        %v732 = vadd.f32 %v411, %v731
        %v733 = vpop.f32.mrf.mxu0
        %v734 = vpop.f32.mrf.mxu0
        %v735 = vadd.f32 %v411, %v734
        %v736 = vpop.f32.mrf.mxu0
        %737 = vmatprep.mubr.bf16.mxu0 %v497
        %738 = vmatmul.mubr.bf16.gmra.mxu0 %v496
        %v739 = vpop.f32.mrf.mxu0
        %v740 = vadd.f32 %v411, %v739
        %v741 = vpop.f32.mrf.mxu0
        %v742 = vpop.f32.mrf.mxu0
        %v743 = vadd.f32 %v411, %v742
        %v744 = vpop.f32.mrf.mxu0
        %745 = vmatprep.mubr.bf16.mxu0 %v500
        %746 = vmatmul.mubr.bf16.gmra.mxu0 %v499
        %v747 = vpop.f32.mrf.mxu0
        %v748 = vadd.f32 %v411, %v747
        %v749 = vpop.f32.mrf.mxu0
        %v750 = vpop.f32.mrf.mxu0
        %v751 = vadd.f32 %v411, %v750
        %v752 = vpop.f32.mrf.mxu0
        %753 = vmatprep.mubr.bf16.mxu0 %v503
        %754 = vmatmul.mubr.bf16.gmra.mxu0 %v502
        %v755 = vpop.f32.mrf.mxu0
        %v756 = vadd.f32 %v411, %v755
        %v757 = vpop.f32.mrf.mxu0
        %v758 = vpop.f32.mrf.mxu0
        %v759 = vadd.f32 %v411, %v758
        %v760 = vpop.f32.mrf.mxu0
        %761 = vmatprep.mubr.bf16.mxu0 %v506
        %762 = vmatmul.mubr.bf16.gmra.mxu0 %v505
        %v763 = vpop.f32.mrf.mxu0
        %v764 = vadd.f32 %v411, %v763
        %v765 = vpop.f32.mrf.mxu0
        %v766 = vpop.f32.mrf.mxu0
        %v767 = vadd.f32 %v411, %v766
        %v768 = vpop.f32.mrf.mxu0
        %769 = vmatprep.mubr.bf16.mxu0 %v509
        %770 = vmatmul.mubr.bf16.gmra.mxu0 %v508
        %v771 = vpop.f32.mrf.mxu0
        %v772 = vadd.f32 %v411, %v771
        %v773 = vpop.f32.mrf.mxu0
        %v774 = vpop.f32.mrf.mxu0
        %v775 = vadd.f32 %v411, %v774
        %v776 = vpop.f32.mrf.mxu0
        %777 = vmatprep.mubr.bf16.mxu0 %v512
        %778 = vmatmul.mubr.bf16.gmra.mxu0 %v511
        %v779 = vpop.f32.mrf.mxu0
        %v780 = vadd.f32 %v411, %v779
        %v781 = vpop.f32.mrf.mxu0
        %v782 = vpop.f32.mrf.mxu0
        %v783 = vadd.f32 %v411, %v782
        %v784 = vpop.f32.mrf.mxu0
        %785 = vmatprep.mubr.bf16.mxu0 %v515
        %786 = vmatmul.mubr.bf16.gmra.mxu0 %v514
        %v787 = vpop.f32.mrf.mxu0
        %v788 = vadd.f32 %v411, %v787
        %v789 = vpop.f32.mrf.mxu0
        %v790 = vpop.f32.mrf.mxu0
        %v791 = vadd.f32 %v411, %v790
        %v792 = vpop.f32.mrf.mxu0
        %793 = vdwg.mxu0
        %794 = vmatprep.subr.bf16.mxu0 0
        %795 = vmatpush1.bf16.msra.mxu0 0
        %796 = vmatprep.subr.bf16.mxu0 0
        %797 = vmatpush1.bf16.msra.mxu0 %v695
        %798 = vmatprep.subr.bf16.mxu0 0
        %799 = vmatpush1.bf16.msra.mxu0 %v644
        %800 = vmatprep.subr.bf16.mxu0 0
        %801 = vmatpush1.bf16.msra.mxu0 %v643
        %802 = vmatprep.subr.bf16.mxu0 0
        %803 = vmatpush1.bf16.msra.mxu0 %v642
        %804 = vmatprep.subr.bf16.mxu0 0
        %805 = vmatpush1.bf16.msra.mxu0 %v641
        %806 = vmatprep.subr.bf16.mxu0 0
        %807 = vmatpush1.bf16.msra.mxu0 %v640
        %808 = vmatprep.subr.bf16.mxu0 0
        %809 = vmatpush1.bf16.msra.mxu0 %v639
        %810 = vmatprep.subr.bf16.mxu0 0
        %811 = vmatpush2.bf16.msra.mxu0 0
        %812 = vmatprep.subr.bf16.mxu0 0
        %813 = vmatpush2.bf16.msra.mxu0 0
        %814 = vmatprep.subr.bf16.mxu0 0
        %815 = vmatpush2.bf16.msra.mxu0 0
        %816 = vmatprep.subr.bf16.mxu0 0
        %817 = vmatpush2.bf16.msra.mxu0 0
        %818 = vmatprep.subr.bf16.mxu0 0
        %819 = vmatpush2.bf16.msra.mxu0 0
        %820 = vmatprep.subr.bf16.mxu0 0
        %821 = vmatpush2.bf16.msra.mxu0 0
        %822 = vmatprep.subr.bf16.mxu0 0
        %823 = vmatpush2.bf16.msra.mxu0 0
        %824 = vmatprep.subr.bf16.mxu0 0
        %825 = vmatpush2.bf16.msra.mxu0 0
        %826 = vmatprep.mubr.bf16.mxu0 0
        %827 = vmatmul.mubr.bf16.gmra.mxu0 %v670
        %v828 = vpop.f32.mrf.mxu0
        %v829 = vadd.f32 %v732, %v828
        %v830 = vpop.f32.mrf.mxu0
        %v831 = vpop.f32.mrf.mxu0
        %v832 = vadd.f32 %v735, %v831
        %v833 = vpop.f32.mrf.mxu0
        %834 = vmatprep.mubr.bf16.mxu0 0
        %835 = vmatmul.mubr.bf16.gmra.mxu0 %v673
        %v836 = vpop.f32.mrf.mxu0
        %v837 = vadd.f32 %v740, %v836
        %v838 = vpop.f32.mrf.mxu0
        %v839 = vpop.f32.mrf.mxu0
        %v840 = vadd.f32 %v743, %v839
        %v841 = vpop.f32.mrf.mxu0
        %842 = vmatprep.mubr.bf16.mxu0 0
        %843 = vmatmul.mubr.bf16.gmra.mxu0 %v676
        %v844 = vpop.f32.mrf.mxu0
        %v845 = vadd.f32 %v748, %v844
        %v846 = vpop.f32.mrf.mxu0
        %v847 = vpop.f32.mrf.mxu0
        %v848 = vadd.f32 %v751, %v847
        %v849 = vpop.f32.mrf.mxu0
        %850 = vmatprep.mubr.bf16.mxu0 0
        %851 = vmatmul.mubr.bf16.gmra.mxu0 %v679
        %v852 = vpop.f32.mrf.mxu0
        %v853 = vadd.f32 %v756, %v852
        %v854 = vpop.f32.mrf.mxu0
        %v855 = vpop.f32.mrf.mxu0
        %v856 = vadd.f32 %v759, %v855
        %v857 = vpop.f32.mrf.mxu0
        %858 = vmatprep.mubr.bf16.mxu0 0
        %859 = vmatmul.mubr.bf16.gmra.mxu0 %v682
        %v860 = vpop.f32.mrf.mxu0
        %v861 = vadd.f32 %v764, %v860
        %v862 = vpop.f32.mrf.mxu0
        %v863 = vpop.f32.mrf.mxu0
        %v864 = vadd.f32 %v767, %v863
        %v865 = vpop.f32.mrf.mxu0
        %866 = vmatprep.mubr.bf16.mxu0 0
        %867 = vmatmul.mubr.bf16.gmra.mxu0 %v685
        %v868 = vpop.f32.mrf.mxu0
        %v869 = vadd.f32 %v772, %v868
        %v870 = vpop.f32.mrf.mxu0
        %v871 = vpop.f32.mrf.mxu0
        %v872 = vadd.f32 %v775, %v871
        %v873 = vpop.f32.mrf.mxu0
        %874 = vmatprep.mubr.bf16.mxu0 0
        %875 = vmatmul.mubr.bf16.gmra.mxu0 %v688
        %v876 = vpop.f32.mrf.mxu0
        %v877 = vadd.f32 %v780, %v876
        %v878 = vpop.f32.mrf.mxu0
        %v879 = vpop.f32.mrf.mxu0
        %v880 = vadd.f32 %v783, %v879
        %v881 = vpop.f32.mrf.mxu0
        %882 = vmatprep.mubr.bf16.mxu0 0
        %883 = vmatmul.mubr.bf16.gmra.mxu0 %v691
        %v884 = vpop.f32.mrf.mxu0
        %v885 = vadd.f32 %v788, %v884
        %v886 = vpop.f32.mrf.mxu0
        %v887 = vpop.f32.mrf.mxu0
        %v888 = vadd.f32 %v791, %v887
        %v889 = vpop.f32.mrf.mxu0
        %890 = vdwg.mxu0
        %v891 = vmax.f32 %v829, 0.0
        %v892 = vmax.f32 %v832, 0.0
        %v893 = vmax.f32 %v837, 0.0
        %v894 = vmax.f32 %v840, 0.0
        %v895 = vmax.f32 %v845, 0.0
        %v896 = vmax.f32 %v848, 0.0
        %v897 = vmax.f32 %v853, 0.0
        %v898 = vmax.f32 %v856, 0.0
        %v899 = vmax.f32 %v861, 0.0
        %v900 = vmax.f32 %v864, 0.0
        %v901 = vmax.f32 %v869, 0.0
        %v902 = vmax.f32 %v872, 0.0
        %v903 = vmax.f32 %v877, 0.0
        %v904 = vmax.f32 %v880, 0.0
        %v905 = vmax.f32 %v885, 0.0
        %v906 = vmax.f32 %v888, 0.0
        %v907 = vpack.c.bf16 %v892, %v891
        %v908 = vpack.c.bf16 %v894, %v893
        %v909 = vpack.c.bf16 %v896, %v895
        %v910 = vpack.c.bf16 %v898, %v897
        %v911 = vpack.c.bf16 %v900, %v899
        %v912 = vpack.c.bf16 %v902, %v901
        %v913 = vpack.c.bf16 %v904, %v903
        %v914 = vpack.c.bf16 %v906, %v905
        %v915 = vld [vmem:[%s3] sm:$0xf]
        %v916 = vld [vmem:[%s3 + $0x4] sm:$0xf]
        %v917 = vld [vmem:[%s3 + $0x8] sm:$0xf]
        %v918 = vld [vmem:[%s3 + $0xc] sm:$0xf]
        %v919 = vld [vmem:[%s3 + $0x10] sm:$0xf]
        %v920 = vld [vmem:[%s3 + $0x14] sm:$0xf]
        %v921 = vld [vmem:[%s3 + $0x18] sm:$0xf]
        %v922 = vld [vmem:[%s3 + $0x1c] sm:$0xf]
        %v923 = vld [vmem:[%s3 + $0x20] sm:$0xf]
        %v924 = vld [vmem:[%s3 + $0x24] sm:$0xf]
        %v925 = vld [vmem:[%s3 + $0x28] sm:$0xf]
        %v926 = vld [vmem:[%s3 + $0x2c] sm:$0xf]
        %v927 = vld [vmem:[%s3 + $0x30] sm:$0xf]
        %v928 = vld [vmem:[%s3 + $0x34] sm:$0xf]
        %v929 = vld [vmem:[%s3 + $0x38] sm:$0xf]
        %v930 = vld [vmem:[%s3 + $0x3c] sm:$0xf]
        %v931 = vld [vmem:[%s4] sm:$0x1]
        %v933 = vlaneseq
        %v934 = vshrl.u32 %v933, 7
        %v935 = vsub.s32 0, %v934
        %v936 = vrot.slane %v931, %v935
        %v954 = vunpack.c.l.b16 %v915
        %v955 = vunpack.c.l.b16 %v916
        %v956 = vunpack.c.l.b16 %v917
        %v957 = vunpack.c.l.b16 %v918
        %v958 = vunpack.c.l.b16 %v919
        %v959 = vunpack.c.l.b16 %v920
        %v960 = vunpack.c.l.b16 %v921
        %v961 = vunpack.c.l.b16 %v922
        %v962 = vunpack.c.l.b16 %v923
        %v963 = vunpack.c.l.b16 %v924
        %v964 = vunpack.c.l.b16 %v925
        %v965 = vunpack.c.l.b16 %v926
        %v966 = vunpack.c.l.b16 %v927
        %v967 = vunpack.c.l.b16 %v928
        %v968 = vunpack.c.l.b16 %v929
        %v969 = vunpack.c.l.b16 %v930
        %v970 = vpack.c.b16 %v955, %v954
        %v971 = vpack.c.b16 %v957, %v956
        %v972 = vpack.c.b16 %v959, %v958
        %v973 = vpack.c.b16 %v961, %v960
        %v974 = vpack.c.b16 %v963, %v962
        %v975 = vpack.c.b16 %v965, %v964
        %v976 = vpack.c.b16 %v967, %v966
        %v977 = vpack.c.b16 %v969, %v968
        %986 = vmatprep.subr.bf16.mxu0 0
        %987 = vmatpush1.bf16.msra.mxu0 %v977
        %988 = vmatprep.subr.bf16.mxu0 0
        %989 = vmatpush1.bf16.msra.mxu0 %v976
        %990 = vmatprep.subr.bf16.mxu0 0
        %991 = vmatpush1.bf16.msra.mxu0 %v975
        %992 = vmatprep.subr.bf16.mxu0 0
        %993 = vmatpush1.bf16.msra.mxu0 %v974
        %994 = vmatprep.subr.bf16.mxu0 0
        %995 = vmatpush1.bf16.msra.mxu0 %v973
        %996 = vmatprep.subr.bf16.mxu0 0
        %997 = vmatpush1.bf16.msra.mxu0 %v972
        %998 = vmatprep.subr.bf16.mxu0 0
        %999 = vmatpush1.bf16.msra.mxu0 %v971
        %1000 = vmatprep.subr.bf16.mxu0 0
        %1001 = vmatpush1.bf16.msra.mxu0 %v970
        %1002 = vmatprep.subr.bf16.mxu0 0
        %1003 = vmatpush2.bf16.msra.mxu0 0
        %1004 = vmatprep.subr.bf16.mxu0 0
        %1005 = vmatpush2.bf16.msra.mxu0 0
        %1006 = vmatprep.subr.bf16.mxu0 0
        %1007 = vmatpush2.bf16.msra.mxu0 0
        %1008 = vmatprep.subr.bf16.mxu0 0
        %1009 = vmatpush2.bf16.msra.mxu0 0
        %1010 = vmatprep.subr.bf16.mxu0 0
        %1011 = vmatpush2.bf16.msra.mxu0 0
        %1012 = vmatprep.subr.bf16.mxu0 0
        %1013 = vmatpush2.bf16.msra.mxu0 0
        %1014 = vmatprep.subr.bf16.mxu0 0
        %1015 = vmatpush2.bf16.msra.mxu0 0
        %1016 = vmatprep.subr.bf16.mxu0 0
        %1017 = vmatpush2.bf16.msra.mxu0 0
        %1018 = vmatprep.mubr.bf16.mxu0 0
        %1019 = vmatmul.mubr.bf16.gmra.mxu0 %v907
        %v1020 = vpop.f32.mrf.mxu0
        %v1021 = vadd.f32 %v936, %v1020
        %v1022 = vpop.f32.mrf.mxu0
        %v1023 = vpop.f32.mrf.mxu0
        %v1024 = vadd.f32 %v936, %v1023
        %v1025 = vpop.f32.mrf.mxu0
        %1026 = vmatprep.mubr.bf16.mxu0 0
        %1027 = vmatmul.mubr.bf16.gmra.mxu0 %v908
        %v1028 = vpop.f32.mrf.mxu0
        %v1029 = vadd.f32 %v936, %v1028
        %v1030 = vpop.f32.mrf.mxu0
        %v1031 = vpop.f32.mrf.mxu0
        %v1032 = vadd.f32 %v936, %v1031
        %v1033 = vpop.f32.mrf.mxu0
        %1034 = vmatprep.mubr.bf16.mxu0 0
        %1035 = vmatmul.mubr.bf16.gmra.mxu0 %v909
        %v1036 = vpop.f32.mrf.mxu0
        %v1037 = vadd.f32 %v936, %v1036
        %v1038 = vpop.f32.mrf.mxu0
        %v1039 = vpop.f32.mrf.mxu0
        %v1040 = vadd.f32 %v936, %v1039
        %v1041 = vpop.f32.mrf.mxu0
        %1042 = vmatprep.mubr.bf16.mxu0 0
        %1043 = vmatmul.mubr.bf16.gmra.mxu0 %v910
        %v1044 = vpop.f32.mrf.mxu0
        %v1045 = vadd.f32 %v936, %v1044
        %v1046 = vpop.f32.mrf.mxu0
        %v1047 = vpop.f32.mrf.mxu0
        %v1048 = vadd.f32 %v936, %v1047
        %v1049 = vpop.f32.mrf.mxu0
        %1050 = vmatprep.mubr.bf16.mxu0 0
        %1051 = vmatmul.mubr.bf16.gmra.mxu0 %v911
        %v1052 = vpop.f32.mrf.mxu0
        %v1053 = vadd.f32 %v936, %v1052
        %v1054 = vpop.f32.mrf.mxu0
        %v1055 = vpop.f32.mrf.mxu0
        %v1056 = vadd.f32 %v936, %v1055
        %v1057 = vpop.f32.mrf.mxu0
        %1058 = vmatprep.mubr.bf16.mxu0 0
        %1059 = vmatmul.mubr.bf16.gmra.mxu0 %v912
        %v1060 = vpop.f32.mrf.mxu0
        %v1061 = vadd.f32 %v936, %v1060
        %v1062 = vpop.f32.mrf.mxu0
        %v1063 = vpop.f32.mrf.mxu0
        %v1064 = vadd.f32 %v936, %v1063
        %v1065 = vpop.f32.mrf.mxu0
        %1066 = vmatprep.mubr.bf16.mxu0 0
        %1067 = vmatmul.mubr.bf16.gmra.mxu0 %v913
        %v1068 = vpop.f32.mrf.mxu0
        %v1069 = vadd.f32 %v936, %v1068
        %v1070 = vpop.f32.mrf.mxu0
        %v1071 = vpop.f32.mrf.mxu0
        %v1072 = vadd.f32 %v936, %v1071
        %v1073 = vpop.f32.mrf.mxu0
        %1074 = vmatprep.mubr.bf16.mxu0 0
        %1075 = vmatmul.mubr.bf16.gmra.mxu0 %v914
        %v1076 = vpop.f32.mrf.mxu0
        %v1077 = vadd.f32 %v936, %v1076
        %v1078 = vpop.f32.mrf.mxu0
        %v1079 = vpop.f32.mrf.mxu0
        %v1080 = vadd.f32 %v936, %v1079
        %v1081 = vpop.f32.mrf.mxu0
        %1082 = vdwg.mxu0
        %v1083 = vmax.f32 %v1021, 0.0
        %v1084 = vmax.f32 %v1024, 0.0
        %v1085 = vmax.f32 %v1029, 0.0
        %v1086 = vmax.f32 %v1032, 0.0
        %v1087 = vmax.f32 %v1037, 0.0
        %v1088 = vmax.f32 %v1040, 0.0
        %v1089 = vmax.f32 %v1045, 0.0
        %v1090 = vmax.f32 %v1048, 0.0
        %v1091 = vmax.f32 %v1053, 0.0
        %v1092 = vmax.f32 %v1056, 0.0
        %v1093 = vmax.f32 %v1061, 0.0
        %v1094 = vmax.f32 %v1064, 0.0
        %v1095 = vmax.f32 %v1069, 0.0
        %v1096 = vmax.f32 %v1072, 0.0
        %v1097 = vmax.f32 %v1077, 0.0
        %v1098 = vmax.f32 %v1080, 0.0
        %v1099 = vld [vmem:[%s5] sm:$0x1]
        %v1101 = vlaneseq
        %v1102 = vshrl.u32 %v1101, 7
        %v1103 = vsub.s32 0, %v1102
        %v1104 = vrot.slane %v1099, %v1103
        %v1106 = vmul.f32 %v1083, %v1104
        %v1107 = vmul.f32 %v1084, %v1104
        %v1108 = vmul.f32 %v1085, %v1104
        %v1109 = vmul.f32 %v1086, %v1104
        %v1110 = vmul.f32 %v1087, %v1104
        %v1111 = vmul.f32 %v1088, %v1104
        %v1112 = vmul.f32 %v1089, %v1104
        %v1113 = vmul.f32 %v1090, %v1104
        %v1114 = vmul.f32 %v1091, %v1104
        %v1115 = vmul.f32 %v1092, %v1104
        %v1116 = vmul.f32 %v1093, %v1104
        %v1117 = vmul.f32 %v1094, %v1104
        %v1118 = vmul.f32 %v1095, %v1104
        %v1119 = vmul.f32 %v1096, %v1104
        %v1120 = vmul.f32 %v1097, %v1104
        %v1121 = vmul.f32 %v1098, %v1104
        %vm1122 = vcmask 523264
        %v1123 = vsel %vm1122, %v1106, 0.0
        %1124 = vadd.xlane.f32.xlu0 %v1123
        %v1125 = vpop.xlane.xlu0 %1124
        %v1126 = vsel %vm1122, %v1107, 0.0
        %1127 = vadd.xlane.f32.xlu0 %v1126
        %v1128 = vpop.xlane.xlu0 %1127
        %v1129 = vsel %vm1122, %v1108, 0.0
        %1130 = vadd.xlane.f32.xlu0 %v1129
        %v1131 = vpop.xlane.xlu0 %1130
        %v1132 = vsel %vm1122, %v1109, 0.0
        %1133 = vadd.xlane.f32.xlu0 %v1132
        %v1134 = vpop.xlane.xlu0 %1133
        %v1135 = vsel %vm1122, %v1110, 0.0
        %1136 = vadd.xlane.f32.xlu0 %v1135
        %v1137 = vpop.xlane.xlu0 %1136
        %v1138 = vsel %vm1122, %v1111, 0.0
        %1139 = vadd.xlane.f32.xlu0 %v1138
        %v1140 = vpop.xlane.xlu0 %1139
        %v1141 = vsel %vm1122, %v1112, 0.0
        %1142 = vadd.xlane.f32.xlu0 %v1141
        %v1143 = vpop.xlane.xlu0 %1142
        %v1144 = vsel %vm1122, %v1113, 0.0
        %1145 = vadd.xlane.f32.xlu0 %v1144
        %v1146 = vpop.xlane.xlu0 %1145
        %v1147 = vsel %vm1122, %v1114, 0.0
        %1148 = vadd.xlane.f32.xlu0 %v1147
        %v1149 = vpop.xlane.xlu0 %1148
        %v1150 = vsel %vm1122, %v1115, 0.0
        %1151 = vadd.xlane.f32.xlu0 %v1150
        %v1152 = vpop.xlane.xlu0 %1151
        %v1153 = vsel %vm1122, %v1116, 0.0
        %1154 = vadd.xlane.f32.xlu0 %v1153
        %v1155 = vpop.xlane.xlu0 %1154
        %v1156 = vsel %vm1122, %v1117, 0.0
        %1157 = vadd.xlane.f32.xlu0 %v1156
        %v1158 = vpop.xlane.xlu0 %1157
        %v1159 = vsel %vm1122, %v1118, 0.0
        %1160 = vadd.xlane.f32.xlu0 %v1159
        %v1161 = vpop.xlane.xlu0 %1160
        %v1162 = vsel %vm1122, %v1119, 0.0
        %1163 = vadd.xlane.f32.xlu0 %v1162
        %v1164 = vpop.xlane.xlu0 %1163
        %v1165 = vsel %vm1122, %v1120, 0.0
        %1166 = vadd.xlane.f32.xlu0 %v1165
        %v1167 = vpop.xlane.xlu0 %1166
        %v1168 = vsel %vm1122, %v1121, 0.0
        %1169 = vadd.xlane.f32.xlu0 %v1168
        %v1170 = vpop.xlane.xlu0 %1169
        %s1171 = sld [smem:[#allocation2]]
        %v1172 = vstv %s1171
        %v1173 = vadd.f32 %v1125, %v1172
        %v1174 = vadd.f32 %v1128, %v1172
        %v1175 = vadd.f32 %v1131, %v1172
        %v1176 = vadd.f32 %v1134, %v1172
        %v1177 = vadd.f32 %v1137, %v1172
        %v1178 = vadd.f32 %v1140, %v1172
        %v1179 = vadd.f32 %v1143, %v1172
        %v1180 = vadd.f32 %v1146, %v1172
        %v1181 = vadd.f32 %v1149, %v1172
        %v1182 = vadd.f32 %v1152, %v1172
        %v1183 = vadd.f32 %v1155, %v1172
        %v1184 = vadd.f32 %v1158, %v1172
        %v1185 = vadd.f32 %v1161, %v1172
        %v1186 = vadd.f32 %v1164, %v1172
        %v1187 = vadd.f32 %v1167, %v1172
        %v1188 = vadd.f32 %v1170, %v1172
        %vm1189 = vcmask 7168
        %1190 = vst.msk [vmem:[%s316] sm:$0xff] %vm1189, %v1173
        %1191 = vst.msk [vmem:[%s316 + $0x8] sm:$0xff] %vm1189, %v1174
        %1192 = vst.msk [vmem:[%s316 + $0x10] sm:$0xff] %vm1189, %v1175
        %1193 = vst.msk [vmem:[%s316 + $0x18] sm:$0xff] %vm1189, %v1176
        %1194 = vst.msk [vmem:[%s316 + $0x20] sm:$0xff] %vm1189, %v1177
        %1195 = vst.msk [vmem:[%s316 + $0x28] sm:$0xff] %vm1189, %v1178
        %1196 = vst.msk [vmem:[%s316 + $0x30] sm:$0xff] %vm1189, %v1179
        %1197 = vst.msk [vmem:[%s316 + $0x38] sm:$0xff] %vm1189, %v1180
        %1198 = vst.msk [vmem:[%s316 + $0x40] sm:$0xff] %vm1189, %v1181
        %1199 = vst.msk [vmem:[%s316 + $0x48] sm:$0xff] %vm1189, %v1182
        %1200 = vst.msk [vmem:[%s316 + $0x50] sm:$0xff] %vm1189, %v1183
        %1201 = vst.msk [vmem:[%s316 + $0x58] sm:$0xff] %vm1189, %v1184
        %1202 = vst.msk [vmem:[%s316 + $0x60] sm:$0xff] %vm1189, %v1185
        %1203 = vst.msk [vmem:[%s316 + $0x68] sm:$0xff] %vm1189, %v1186
        %1204 = vst.msk [vmem:[%s316 + $0x70] sm:$0xff] %vm1189, %v1187
        %1205 = vst.msk [vmem:[%s316 + $0x78] sm:$0xff] %vm1189, %v1188
        %s1206 = sand.u32 %s183, 1
        %s1207 = sand.u32 %s183, 1
        %s1208 = smul.addr %s1207, 128
        %s1209 = scalar_lea.vmem [#allocation7], %s1208
        // Predicated region
        $region57: #{tpu_custom_call.1} parent=47 // pred_check
          %p1210 = pneg %p193
        $region58: #{tpu_custom_call.1} parent=47 // pred_check_branch
          %1212 = sbr.rel (%p1210) target = $region60
        $region59: #{tpu_custom_call.1} parent=47 // pred_region
          %s1213 = smul.u32 16, %s23
          %s1214 = ssub.s32 38, %s1213
          %p1215 = scmp.lt.s32.totalorder %s1214, 16
          %s1216 = scalar_select %p1215, %s1214, 16
          %s1217 = smul.u32 128, %s1216
          %p1218 = scmp.ne.s32.totalorder 0, %s1217
          %s1219 = smul.addr %s1213, 8
          %s1220 = scalar_lea.vmem %s7, %s1219
          // Predicated region
          $region61: #{tpu_custom_call.1} parent=59 // pred_check
            %p1221 = pneg %p1218
          $region62: #{tpu_custom_call.1} parent=59 // pred_check_branch
            %1223 = sbr.rel (%p1221) target = $region64
          $region63: #{tpu_custom_call.1} parent=59 // pred_region
            // Predicated region
            $region65: #{tpu_custom_call.1} parent=63 // pred_check
              _
            $region66: #{tpu_custom_call.1} parent=63 // pred_check_branch
              %1225 = sbr.rel (0) target = $region68
            $region67: #{tpu_custom_call.1} parent=63 // pred_region
              // Predicated region
              $region87: #{tpu_custom_call.1} parent=67 // pred_check
                _
              $region88: #{tpu_custom_call.1} parent=67 // pred_check_branch
                %1305 = sbr.rel (0) target = $region90
              $region89: #{tpu_custom_call.1} parent=67 // pred_region
                %s1306 = sshrl.u32 %s1216, 4
                // While loop
                $region91: #{tpu_custom_call.1} parent=89 // loop_pre_header
                  _
                $region92: #{tpu_custom_call.1} parent=89 // loop_header
                  %s1308 = sphi 0, %s1310
                  %p1309 = scmp.ge.s32.totalorder %s1308, %s1306
                  %s1313 = sphi 0, %s1350
                  %s1314 = sphi %s1209, %s1353
                  %s1315 = sphi %s1220, %s1354
                $region93: #{tpu_custom_call.1} parent=89 // loop_header_branch
                  %1312 = sbr.rel (%p1309) target = $region97
                $region94: #{tpu_custom_call.1} parent=89 // loop_body
                  %v1316 = vld [vmem:[%s1314] sm:$0xff]
                  %1317 = vst [vmem:[%s1315] sm:$0xff] %v1316
                  %v1318 = vld [vmem:[%s1314 + $0x8] sm:$0xff]
                  %1319 = vst [vmem:[%s1315 + $0x8] sm:$0xff] %v1318
                  %v1320 = vld [vmem:[%s1314 + $0x10] sm:$0xff]
                  %1321 = vst [vmem:[%s1315 + $0x10] sm:$0xff] %v1320
                  %v1322 = vld [vmem:[%s1314 + $0x18] sm:$0xff]
                  %1323 = vst [vmem:[%s1315 + $0x18] sm:$0xff] %v1322
                  %v1324 = vld [vmem:[%s1314 + $0x20] sm:$0xff]
                  %1325 = vst [vmem:[%s1315 + $0x20] sm:$0xff] %v1324
                  %v1326 = vld [vmem:[%s1314 + $0x28] sm:$0xff]
                  %1327 = vst [vmem:[%s1315 + $0x28] sm:$0xff] %v1326
                  %v1328 = vld [vmem:[%s1314 + $0x30] sm:$0xff]
                  %1329 = vst [vmem:[%s1315 + $0x30] sm:$0xff] %v1328
                  %v1330 = vld [vmem:[%s1314 + $0x38] sm:$0xff]
                  %1331 = vst [vmem:[%s1315 + $0x38] sm:$0xff] %v1330
                  %v1332 = vld [vmem:[%s1314 + $0x40] sm:$0xff]
                  %1333 = vst [vmem:[%s1315 + $0x40] sm:$0xff] %v1332
                  %v1334 = vld [vmem:[%s1314 + $0x48] sm:$0xff]
                  %1335 = vst [vmem:[%s1315 + $0x48] sm:$0xff] %v1334
                  %v1336 = vld [vmem:[%s1314 + $0x50] sm:$0xff]
                  %1337 = vst [vmem:[%s1315 + $0x50] sm:$0xff] %v1336
                  %v1338 = vld [vmem:[%s1314 + $0x58] sm:$0xff]
                  %1339 = vst [vmem:[%s1315 + $0x58] sm:$0xff] %v1338
                  %v1340 = vld [vmem:[%s1314 + $0x60] sm:$0xff]
                  %1341 = vst [vmem:[%s1315 + $0x60] sm:$0xff] %v1340
                  %v1342 = vld [vmem:[%s1314 + $0x68] sm:$0xff]
                  %1343 = vst [vmem:[%s1315 + $0x68] sm:$0xff] %v1342
                  %v1344 = vld [vmem:[%s1314 + $0x70] sm:$0xff]
                  %1345 = vst [vmem:[%s1315 + $0x70] sm:$0xff] %v1344
                  %v1346 = vld [vmem:[%s1314 + $0x78] sm:$0xff]
                  %1347 = vst [vmem:[%s1315 + $0x78] sm:$0xff] %v1346
                  %s1348 = sadd.s32 1, %s1313
                  %p1349 = scmp.ge.s32.totalorder %s1348, %s1306
                  %s1350 = scalar_select %p1349, 0, %s1348
                  %s1351 = smul.u32 %s1350, 128
                  %s1352 = smul.u32 %s1350, 128
                  %s1353 = scalar_lea.vmem %s1209, %s1351 [#allocation7]
                  %s1354 = scalar_lea.vmem %s1220, %s1352
                $region95: #{tpu_custom_call.1} parent=89 // loop_footer
                  %s1310 = sadd.s32 %s1308, 1
                $region96: #{tpu_custom_call.1} parent=89 // loop_footer_branch
                  %1307 = sbr.rel target = $region92
                $region97: #{tpu_custom_call.1} parent=89 // loop_exit
                  _
                %s1355 = sshrl.u32 %s1216, 4
                %s1356 = sand.u32 %s1216, 15
                %s1357 = smul.u32 %s1355, 16
                %s1358 = smul.u32 8, %s1357
                %s1359 = scalar_lea.vmem %s1209, %s1358 [#allocation7]
                %s1360 = smul.u32 8, %s1357
                %s1361 = scalar_lea.vmem %s1220, %s1360
                // While loop
                $region98: #{tpu_custom_call.1} parent=89 // loop_pre_header
                  _
                $region99: #{tpu_custom_call.1} parent=89 // loop_header
                  %s1363 = sphi 0, %s1365
                  %p1364 = scmp.ge.s32.totalorder %s1363, %s1356
                  %s1368 = sphi 0, %s1375
                  %s1369 = sphi %s1359, %s1378
                  %s1370 = sphi %s1361, %s1379
                $region100: #{tpu_custom_call.1} parent=89 // loop_header_branch
                  %1367 = sbr.rel (%p1364) target = $region104
                $region101: #{tpu_custom_call.1} parent=89 // loop_body
                  %v1371 = vld [vmem:[%s1369] sm:$0xff]
                  %1372 = vst [vmem:[%s1370] sm:$0xff] %v1371
                  %s1373 = sadd.s32 1, %s1368
                  %p1374 = scmp.ge.s32.totalorder %s1373, %s1356
                  %s1375 = scalar_select %p1374, 0, %s1373
                  %s1376 = smul.u32 %s1375, 8
                  %s1377 = smul.u32 %s1375, 8
                  %s1378 = scalar_lea.vmem %s1359, %s1376 [#allocation7]
                  %s1379 = scalar_lea.vmem %s1361, %s1377
                $region102: #{tpu_custom_call.1} parent=89 // loop_footer
                  %s1365 = sadd.s32 %s1363, 1
                $region103: #{tpu_custom_call.1} parent=89 // loop_footer_branch
                  %1362 = sbr.rel target = $region99
                $region104: #{tpu_custom_call.1} parent=89 // loop_exit
                  _
              $region90: #{tpu_custom_call.1} parent=67 // pred_fallthru
                _
              // Predicated region
              $region105: #{tpu_custom_call.1} parent=67 // pred_check
                _
              $region106: #{tpu_custom_call.1} parent=67 // pred_check_branch
                %1381 = sbr.rel target = $region108
              $region107: #{tpu_custom_call.1} parent=67 // pred_region
                _
              $region108: #{tpu_custom_call.1} parent=67 // pred_fallthru
                _
            $region68: #{tpu_custom_call.1} parent=63 // pred_fallthru
              _
            // Predicated region
            $region69: #{tpu_custom_call.1} parent=63 // pred_check
              _
            $region70: #{tpu_custom_call.1} parent=63 // pred_check_branch
              %1227 = sbr.rel target = $region72
            $region71: #{tpu_custom_call.1} parent=63 // pred_region
              %s1229 = ssub.s32 256, 1
              %s1230 = sshrl.u32 %s1216, 4
              // While loop
              $region73: #{tpu_custom_call.1} parent=71 // loop_pre_header
                _
              $region74: #{tpu_custom_call.1} parent=71 // loop_header
                %s1232 = sphi 0, %s1234
                %p1233 = scmp.ge.s32.totalorder %s1232, %s1230
                %s1237 = sphi 0, %s1274
                %s1238 = sphi %s1209, %s1277
                %s1239 = sphi %s1220, %s1278
              $region75: #{tpu_custom_call.1} parent=71 // loop_header_branch
                %1236 = sbr.rel (%p1233) target = $region79
              $region76: #{tpu_custom_call.1} parent=71 // loop_body
                %v1240 = vld [vmem:[%s1238] sm:%s1229]
                %1241 = vst [vmem:[%s1239] sm:%s1229] %v1240
                %v1242 = vld [vmem:[%s1238 + $0x8] sm:%s1229]
                %1243 = vst [vmem:[%s1239 + $0x8] sm:%s1229] %v1242
                %v1244 = vld [vmem:[%s1238 + $0x10] sm:%s1229]
                %1245 = vst [vmem:[%s1239 + $0x10] sm:%s1229] %v1244
                %v1246 = vld [vmem:[%s1238 + $0x18] sm:%s1229]
                %1247 = vst [vmem:[%s1239 + $0x18] sm:%s1229] %v1246
                %v1248 = vld [vmem:[%s1238 + $0x20] sm:%s1229]
                %1249 = vst [vmem:[%s1239 + $0x20] sm:%s1229] %v1248
                %v1250 = vld [vmem:[%s1238 + $0x28] sm:%s1229]
                %1251 = vst [vmem:[%s1239 + $0x28] sm:%s1229] %v1250
                %v1252 = vld [vmem:[%s1238 + $0x30] sm:%s1229]
                %1253 = vst [vmem:[%s1239 + $0x30] sm:%s1229] %v1252
                %v1254 = vld [vmem:[%s1238 + $0x38] sm:%s1229]
                %1255 = vst [vmem:[%s1239 + $0x38] sm:%s1229] %v1254
                %v1256 = vld [vmem:[%s1238 + $0x40] sm:%s1229]
                %1257 = vst [vmem:[%s1239 + $0x40] sm:%s1229] %v1256
                %v1258 = vld [vmem:[%s1238 + $0x48] sm:%s1229]
                %1259 = vst [vmem:[%s1239 + $0x48] sm:%s1229] %v1258
                %v1260 = vld [vmem:[%s1238 + $0x50] sm:%s1229]
                %1261 = vst [vmem:[%s1239 + $0x50] sm:%s1229] %v1260
                %v1262 = vld [vmem:[%s1238 + $0x58] sm:%s1229]
                %1263 = vst [vmem:[%s1239 + $0x58] sm:%s1229] %v1262
                %v1264 = vld [vmem:[%s1238 + $0x60] sm:%s1229]
                %1265 = vst [vmem:[%s1239 + $0x60] sm:%s1229] %v1264
                %v1266 = vld [vmem:[%s1238 + $0x68] sm:%s1229]
                %1267 = vst [vmem:[%s1239 + $0x68] sm:%s1229] %v1266
                %v1268 = vld [vmem:[%s1238 + $0x70] sm:%s1229]
                %1269 = vst [vmem:[%s1239 + $0x70] sm:%s1229] %v1268
                %v1270 = vld [vmem:[%s1238 + $0x78] sm:%s1229]
                %1271 = vst [vmem:[%s1239 + $0x78] sm:%s1229] %v1270
                %s1272 = sadd.s32 1, %s1237
                %p1273 = scmp.ge.s32.totalorder %s1272, %s1230
                %s1274 = scalar_select %p1273, 0, %s1272
                %s1275 = smul.u32 %s1274, 128
                %s1276 = smul.u32 %s1274, 128
                %s1277 = scalar_lea.vmem %s1209, %s1275 [#allocation7]
                %s1278 = scalar_lea.vmem %s1220, %s1276
              $region77: #{tpu_custom_call.1} parent=71 // loop_footer
                %s1234 = sadd.s32 %s1232, 1
              $region78: #{tpu_custom_call.1} parent=71 // loop_footer_branch
                %1231 = sbr.rel target = $region74
              $region79: #{tpu_custom_call.1} parent=71 // loop_exit
                _
              %s1279 = sshrl.u32 %s1216, 4
              %s1280 = sand.u32 %s1216, 15
              %s1281 = smul.u32 %s1279, 16
              %s1282 = smul.u32 8, %s1281
              %s1283 = scalar_lea.vmem %s1209, %s1282 [#allocation7]
              %s1284 = smul.u32 8, %s1281
              %s1285 = scalar_lea.vmem %s1220, %s1284
              // While loop
              $region80: #{tpu_custom_call.1} parent=71 // loop_pre_header
                _
              $region81: #{tpu_custom_call.1} parent=71 // loop_header
                %s1287 = sphi 0, %s1289
                %p1288 = scmp.ge.s32.totalorder %s1287, %s1280
                %s1292 = sphi 0, %s1299
                %s1293 = sphi %s1283, %s1302
                %s1294 = sphi %s1285, %s1303
              $region82: #{tpu_custom_call.1} parent=71 // loop_header_branch
                %1291 = sbr.rel (%p1288) target = $region86
              $region83: #{tpu_custom_call.1} parent=71 // loop_body
                %v1295 = vld [vmem:[%s1293] sm:%s1229]
                %1296 = vst [vmem:[%s1294] sm:%s1229] %v1295
                %s1297 = sadd.s32 1, %s1292
                %p1298 = scmp.ge.s32.totalorder %s1297, %s1280
                %s1299 = scalar_select %p1298, 0, %s1297
                %s1300 = smul.u32 %s1299, 8
                %s1301 = smul.u32 %s1299, 8
                %s1302 = scalar_lea.vmem %s1283, %s1300 [#allocation7]
                %s1303 = scalar_lea.vmem %s1285, %s1301
              $region84: #{tpu_custom_call.1} parent=71 // loop_footer
                %s1289 = sadd.s32 %s1287, 1
              $region85: #{tpu_custom_call.1} parent=71 // loop_footer_branch
                %1286 = sbr.rel target = $region81
              $region86: #{tpu_custom_call.1} parent=71 // loop_exit
                _
            $region72: #{tpu_custom_call.1} parent=63 // pred_fallthru
              _
          $region64: #{tpu_custom_call.1} parent=59 // pred_fallthru
            _
          %1382 = vnop
        $region60: #{tpu_custom_call.1} parent=47 // pred_fallthru
          _
      $region48: #{tpu_custom_call.1} parent=5 // pred_fallthru
        _
      %p1383 = scmp.le.s32.totalorder 2, %s18
      // Predicated region
      $region109: #{tpu_custom_call.1} parent=5 // pred_check
        %p1384 = pneg %p1383
      $region110: #{tpu_custom_call.1} parent=5 // pred_check_branch
        %1386 = sbr.rel (%p1384) target = $region112
      $region111: #{tpu_custom_call.1} parent=5 // pred_region
        %s1387 = ssub.s32 %s18, 2
        // Predicated region
        $region113: #{tpu_custom_call.1} parent=111 // pred_check
          %p1388 = pneg %p199
        $region114: #{tpu_custom_call.1} parent=111 // pred_check_branch
          %1390 = sbr.rel (%p1388) target = $region116
        $region115: #{tpu_custom_call.1} parent=111 // pred_region
          %s1391 = sand.u32 %s184, 1
          %s1392 = sand.u32 %s184, 1
          %s1393 = smul.addr %s1392, 128
          %s1394 = scalar_lea.vmem [#allocation7], %s1393
        $region116: #{tpu_custom_call.1} parent=111 // pred_fallthru
          _
      $region112: #{tpu_custom_call.1} parent=5 // pred_fallthru
        _
    $region6: #{tpu_custom_call.1} parent=1 // loop_footer
      %s22 = sadd.s32 1, %s18
    $region7: #{tpu_custom_call.1} parent=1 // loop_footer_branch
      %17 = sbr.rel target = $region3
    $region8: #{tpu_custom_call.1} parent=1 // loop_exit
      _
    %1395 = vsyncpa [#allocation4], 1
    %s1396 = scalar_lea.sflag [#allocation4], 1
    %1397 = vsyncpa %s1396, 1
    %1398 = vsyncpa [#allocation6], 1

</llo_original>
